<compile_context>
chip_gen: v7x
topology: tpu7x:2x2x1
jax: 0.10.0
libtpu: 0.0.40
codegen_flags: <defaults>
</compile_context>

<pallas_src>
import jax
import jax.numpy as jnp
from jax.experimental import pallas as pl
from jax.experimental.pallas import tpu as pltpu


# ---------------------------------------------------------------------------
# Fused Pallas kernel:  conv1x1 -> bilinear upsample (as matmul) -> BatchNorm
# (training-mode batch stats) -> Sigmoid.   Channel-major, spatial on lanes.
# ---------------------------------------------------------------------------
def _outconv_kernel(x_ref, mt_ref, w_ref, g_ref, b_ref, o_ref):
    # x_ref : (N, Cin, Pin)   f32   NCHW with H*W flattened onto the lane axis
    # mt_ref: (Pin, Pout)     bf16  transposed bilinear operator kron(Ry, Rx)^T
    # w_ref : (Cout, Cin)     bf16  1x1-conv weight
    # g_ref : (Cout, 1)       f32   BN gamma
    # b_ref : (Cout, 1)       f32   BN beta
    # o_ref : (N, Cout, Pout) f32
    N, _, _ = x_ref.shape
    _, Cout, Pout = o_ref.shape

    w = w_ref[...]                                    # (Cout, Cin)  bf16
    mt = mt_ref[...]                                  # (Pin, Pout)  bf16
    inv_count = 1.0 / float(N * Pout)

    # --- 1x1 conv then bilinear upsample, per batch element (static unroll, N tiny).
    #     Both matmuls are lane-dense on their output (Pin / Pout on the lane axis)
    #     and accumulate in f32 on the MXU.
    ups = []
    for n in range(N):
        xn = x_ref[n].astype(jnp.bfloat16)                            # (Cin, Pin)
        yn = jnp.dot(w, xn, preferred_element_type=jnp.float32)       # (Cout, Pin)
        un = jnp.dot(yn.astype(jnp.bfloat16), mt,
                     preferred_element_type=jnp.float32)              # (Cout, Pout)
        ups.append(un)

    # --- BatchNorm2d, training mode: per-channel batch statistics over (N, H, W),
    #     biased variance, eps = 1e-5.  Two-pass mean/var in f32.
    total = ups[0]
    for u in ups[1:]:
        total = total + u
    mean = jnp.sum(total, axis=1, keepdims=True) * inv_count          # (Cout, 1)

    sqsum = jnp.zeros_like(mean)
    for u in ups:
        d = u - mean
        sqsum = sqsum + jnp.sum(d * d, axis=1, keepdims=True)
    var = sqsum * inv_count
    inv_std = jax.lax.rsqrt(var + 1e-5)                               # (Cout, 1)

    scale = g_ref[...] * inv_std                                      # (Cout, 1)
    shift = b_ref[...] - mean * scale                                 # (Cout, 1)

    # --- normalize + affine + sigmoid; store lane-dense (Pout on the lane axis).
    for n in range(N):
        z = ups[n] * scale + shift
        o_ref[n] = 1.0 / (1.0 + jnp.exp(-z))                          # exp -> EUP


# ---------------------------------------------------------------------------
# Wrapper
# ---------------------------------------------------------------------------
def _interp_matrix_1d(n_in: int, n_out: int) -> jnp.ndarray:
    """(n_out, n_in) linear-interpolation operator, PyTorch align_corners=True."""
    if n_out == 1 or n_in == 1:
        src = jnp.zeros((n_out,), jnp.float32)
    else:
        src = jnp.arange(n_out, dtype=jnp.float32) * ((n_in - 1) / (n_out - 1))
    i0 = jnp.clip(jnp.floor(src).astype(jnp.int32), 0, n_in - 1)
    i1 = jnp.minimum(i0 + 1, n_in - 1)
    frac = src - i0.astype(jnp.float32)
    lo = jax.nn.one_hot(i0, n_in, dtype=jnp.float32) * (1.0 - frac)[:, None]
    hi = jax.nn.one_hot(i1, n_in, dtype=jnp.float32) * frac[:, None]
    return lo + hi


@jax.jit
def outconv_forward(x, w, gamma, beta):
    """OutConv.forward in NCHW.  x:(N,Cin,H,W), w:(Cout,Cin), gamma/beta:(Cout,)."""
    N, Cin, H, W = x.shape
    Cout = w.shape[0]
    scale = Cin // 32                       # nn.Upsample(scale_factor=in_channels // 32)
    assert scale >= 1, "OutConv requires in_channels >= 32"
    Ho, Wo = H * scale, W * scale
    Pin, Pout = H * W, Ho * Wo

    # Exact bilinear (align_corners=True) upsample operator: out = kron(Ry, Rx) @ vec(x).
    ry = _interp_matrix_1d(H, Ho)                                      # (Ho, H)
    rx = _interp_matrix_1d(W, Wo)                                      # (Wo, W)
    m = jnp.einsum('ab,cd->acbd', ry, rx).reshape(Pout, Pin)           # (Pout, Pin)
    mt = m.T.astype(jnp.bfloat16)                                      # (Pin, Pout)

    x_flat = x.reshape(N, Cin, Pin)            # free reshape: H*W onto the lane axis

    flops = 2 * N * Cout * Pin * (Cin + Pout)
    bytes_accessed = (x_flat.size * 4 + mt.size * 2 + w.size * 2
                      + 2 * Cout * 4 + N * Cout * Pout * 4)

    out = pl.pallas_call(
        _outconv_kernel,
        out_shape=jax.ShapeDtypeStruct((N, Cout, Pout), jnp.float32),
        in_specs=[pl.BlockSpec(memory_space=pltpu.MemorySpace.VMEM)] * 5,
        out_specs=pl.BlockSpec(memory_space=pltpu.MemorySpace.VMEM),
        cost_estimate=pl.CostEstimate(flops=flops,
                                      transcendentals=N * Cout * Pout,
                                      bytes_accessed=bytes_accessed),
    )(x_flat, mt, w.astype(jnp.bfloat16),
      gamma.reshape(Cout, 1).astype(jnp.float32),
      beta.reshape(Cout, 1).astype(jnp.float32))

    return out.reshape(N, Cout, Ho, Wo)


# ---------------------------------------------------------------------------
# Pure-JAX f32 reference following the PyTorch op order exactly (for checking).
# ---------------------------------------------------------------------------
def _reference_outconv(x, w, gamma, beta):
    N, Cin, H, W = x.shape
    scale = Cin // 32
    Ho, Wo = H * scale, W * scale
    ys = jnp.arange(Ho, dtype=jnp.float32) * (H - 1) / (Ho - 1)
    xs = jnp.arange(Wo, dtype=jnp.float32) * (W - 1) / (Wo - 1)
    y0 = jnp.floor(ys).astype(jnp.int32); y1 = jnp.minimum(y0 + 1, H - 1)
    x0 = jnp.floor(xs).astype(jnp.int32); x1 = jnp.minimum(x0 + 1, W - 1)
    wy = (ys - y0.astype(jnp.float32))[None, None, :, None]
    wx = (xs - x0.astype(jnp.float32))[None, None, None, :]
    top = x[:, :, y0, :]
    bot = x[:, :, y1, :]
    top = top[:, :, :, x0] * (1.0 - wx) + top[:, :, :, x1] * wx
    bot = bot[:, :, :, x0] * (1.0 - wx) + bot[:, :, :, x1] * wx
    u = top * (1.0 - wy) + bot * wy                                    # (N, Cin, Ho, Wo)
    y = jnp.einsum('oc,nchw->nohw', w, u)                              # 1x1 conv (bias cancelled by BN)
    mean = jnp.mean(y, axis=(0, 2, 3), keepdims=True)
    var = jnp.mean(jnp.square(y - mean), axis=(0, 2, 3), keepdims=True)
    z = (y - mean) * jax.lax.rsqrt(var + 1e-5)
    z = z * gamma[None, :, None, None] + beta[None, :, None, None]
    return jax.nn.sigmoid(z)


if __name__ == "__main__":
    key = jax.random.PRNGKey(0)
    kx, kw, kg, kb = jax.random.split(key, 4)

    # OutConv(in_channels=64, out_channels=4): scale_factor = 64 // 32 = 2.
    N, Cin, H, W = 2, 64, 16, 16
    Cout = 4

    x = jax.random.normal(kx, (N, Cin, H, W), jnp.float32)
    w = 0.1 * jax.random.normal(kw, (Cout, Cin), jnp.float32)          # Conv2d 1x1 weight
    gamma = 1.0 + 0.1 * jax.random.normal(kg, (Cout,), jnp.float32)    # BN affine
    beta = 0.1 * jax.random.normal(kb, (Cout,), jnp.float32)

    out = outconv_forward(x, w, gamma, beta)
    out = jax.block_until_ready(out)

    assert out.shape == (N, Cout, 2 * H, 2 * W), out.shape
    assert bool(jnp.all(jnp.isfinite(out)))
    assert bool(jnp.all((out >= 0.0) & (out <= 1.0)))                  # sigmoid range

    ref = _reference_outconv(x, w, gamma, beta)
    max_err = float(jnp.max(jnp.abs(out - ref)))
    assert max_err < 5e-2, f"mismatch vs reference: max abs err = {max_err}"

    print("KERNEL_OK")
</pallas_src>

<mosaic_0001>
module attributes {stable_mosaic.version = 11 : i64} {
  func.func @_outconv_kernel(%arg0: memref<2x64x256xf32, #tpu.memory_space<vmem>>, %arg1: memref<256x1024xbf16, #tpu.memory_space<vmem>>, %arg2: memref<4x64xbf16, #tpu.memory_space<vmem>>, %arg3: memref<4x1xf32, #tpu.memory_space<vmem>>, %arg4: memref<4x1xf32, #tpu.memory_space<vmem>>, %arg5: memref<2x4x1024xf32, #tpu.memory_space<vmem>>) attributes {dimension_semantics = [], scalar_prefetch = 0 : i64, scratch_operands = 0 : i64, tpu.core_type = #tpu.core_type<tc>} {
    %c0 = arith.constant 0 : index
    %c0_0 = arith.constant 0 : index
    %0 = vector.load %arg2[%c0, %c0_0] : memref<4x64xbf16, #tpu.memory_space<vmem>>, vector<4x64xbf16>
    %c0_1 = arith.constant 0 : index
    %c0_2 = arith.constant 0 : index
    %1 = vector.load %arg1[%c0_1, %c0_2] : memref<256x1024xbf16, #tpu.memory_space<vmem>>, vector<256x1024xbf16>
    %c0_3 = arith.constant 0 : index
    %c0_4 = arith.constant 0 : index
    %c0_5 = arith.constant 0 : index
    %2 = vector.load %arg0[%c0_3, %c0_4, %c0_5] : memref<2x64x256xf32, #tpu.memory_space<vmem>>, vector<1x64x256xf32>
    %3 = vector.shape_cast %2 : vector<1x64x256xf32> to vector<64x256xf32>
    %4 = arith.truncf %3 : vector<64x256xf32> to vector<64x256xbf16>
    %cst = arith.constant dense<0.000000e+00> : vector<4x256xf32>
    %5 = tpu.matmul %0, %4, %cst {dimension_numbers = #tpu.dot_dimension_numbers<[1], [0], [0], [1], [0, 0, 1, 1], [], []>} : vector<4x64xbf16>, vector<64x256xbf16>, vector<4x256xf32> -> vector<4x256xf32>
    %6 = arith.truncf %5 : vector<4x256xf32> to vector<4x256xbf16>
    %cst_6 = arith.constant dense<0.000000e+00> : vector<4x1024xf32>
    %7 = tpu.matmul %6, %1, %cst_6 {dimension_numbers = #tpu.dot_dimension_numbers<[1], [0], [0], [1], [0, 0, 1, 1], [], []>} : vector<4x256xbf16>, vector<256x1024xbf16>, vector<4x1024xf32> -> vector<4x1024xf32>
    %c1 = arith.constant 1 : index
    %c0_7 = arith.constant 0 : index
    %c0_8 = arith.constant 0 : index
    %8 = vector.load %arg0[%c1, %c0_7, %c0_8] : memref<2x64x256xf32, #tpu.memory_space<vmem>>, vector<1x64x256xf32>
    %9 = vector.shape_cast %8 : vector<1x64x256xf32> to vector<64x256xf32>
    %10 = arith.truncf %9 : vector<64x256xf32> to vector<64x256xbf16>
    %cst_9 = arith.constant dense<0.000000e+00> : vector<4x256xf32>
    %11 = tpu.matmul %0, %10, %cst_9 {dimension_numbers = #tpu.dot_dimension_numbers<[1], [0], [0], [1], [0, 0, 1, 1], [], []>} : vector<4x64xbf16>, vector<64x256xbf16>, vector<4x256xf32> -> vector<4x256xf32>
    %12 = arith.truncf %11 : vector<4x256xf32> to vector<4x256xbf16>
    %cst_10 = arith.constant dense<0.000000e+00> : vector<4x1024xf32>
    %13 = tpu.matmul %12, %1, %cst_10 {dimension_numbers = #tpu.dot_dimension_numbers<[1], [0], [0], [1], [0, 0, 1, 1], [], []>} : vector<4x256xbf16>, vector<256x1024xbf16>, vector<4x1024xf32> -> vector<4x1024xf32>
    %14 = arith.addf %7, %13 : vector<4x1024xf32>
    %cst_11 = arith.constant dense<0.000000e+00> : vector<4xf32>
    %15 = vector.multi_reduction <add>, %14, %cst_11 [1] : vector<4x1024xf32> to vector<4xf32>
    %16 = vector.shape_cast %15 : vector<4xf32> to vector<4x1xf32>
    %cst_12 = arith.constant 4.8828125E-4 : f32
    %17 = vector.broadcast %cst_12 : f32 to vector<4x1xf32>
    %18 = arith.mulf %16, %17 : vector<4x1xf32>
    %cst_13 = arith.constant 0.000000e+00 : f32
    %19 = vector.broadcast %cst_13 : f32 to vector<4x1xf32>
    %20 = vector.broadcast %18 : vector<4x1xf32> to vector<4x1024xf32>
    %21 = arith.subf %7, %20 : vector<4x1024xf32>
    %22 = arith.mulf %21, %21 : vector<4x1024xf32>
    %cst_14 = arith.constant dense<0.000000e+00> : vector<4xf32>
    %23 = vector.multi_reduction <add>, %22, %cst_14 [1] : vector<4x1024xf32> to vector<4xf32>
    %24 = vector.shape_cast %23 : vector<4xf32> to vector<4x1xf32>
    %25 = arith.addf %19, %24 : vector<4x1xf32>
    %26 = vector.broadcast %18 : vector<4x1xf32> to vector<4x1024xf32>
    %27 = arith.subf %13, %26 : vector<4x1024xf32>
    %28 = arith.mulf %27, %27 : vector<4x1024xf32>
    %cst_15 = arith.constant dense<0.000000e+00> : vector<4xf32>
    %29 = vector.multi_reduction <add>, %28, %cst_15 [1] : vector<4x1024xf32> to vector<4xf32>
    %30 = vector.shape_cast %29 : vector<4xf32> to vector<4x1xf32>
    %31 = arith.addf %25, %30 : vector<4x1xf32>
    %cst_16 = arith.constant 4.8828125E-4 : f32
    %32 = vector.broadcast %cst_16 : f32 to vector<4x1xf32>
    %33 = arith.mulf %31, %32 : vector<4x1xf32>
    %cst_17 = arith.constant 9.99999974E-6 : f32
    %34 = vector.broadcast %cst_17 : f32 to vector<4x1xf32>
    %35 = arith.addf %33, %34 : vector<4x1xf32>
    %36 = math.rsqrt %35 : vector<4x1xf32>
    %c0_18 = arith.constant 0 : index
    %c0_19 = arith.constant 0 : index
    %37 = vector.load %arg3[%c0_18, %c0_19] : memref<4x1xf32, #tpu.memory_space<vmem>>, vector<4x1xf32>
    %38 = arith.mulf %37, %36 : vector<4x1xf32>
    %c0_20 = arith.constant 0 : index
    %c0_21 = arith.constant 0 : index
    %39 = vector.load %arg4[%c0_20, %c0_21] : memref<4x1xf32, #tpu.memory_space<vmem>>, vector<4x1xf32>
    %40 = arith.mulf %18, %38 : vector<4x1xf32>
    %41 = arith.subf %39, %40 : vector<4x1xf32>
    %42 = vector.broadcast %38 : vector<4x1xf32> to vector<4x1024xf32>
    %43 = arith.mulf %7, %42 : vector<4x1024xf32>
    %44 = vector.broadcast %41 : vector<4x1xf32> to vector<4x1024xf32>
    %45 = arith.addf %43, %44 : vector<4x1024xf32>
    %cst_22 = arith.constant 0.000000e+00 : f32
    %46 = vector.broadcast %cst_22 : f32 to vector<4x1024xf32>
    %47 = arith.subf %46, %45 : vector<4x1024xf32>
    %48 = math.exp %47 : vector<4x1024xf32>
    %cst_23 = arith.constant 1.000000e+00 : f32
    %49 = vector.broadcast %cst_23 : f32 to vector<4x1024xf32>
    %50 = arith.addf %49, %48 : vector<4x1024xf32>
    %cst_24 = arith.constant 1.000000e+00 : f32
    %51 = vector.broadcast %cst_24 : f32 to vector<4x1024xf32>
    %52 = arith.divf %51, %50 : vector<4x1024xf32>
    %c0_25 = arith.constant 0 : index
    %c0_26 = arith.constant 0 : index
    %c0_27 = arith.constant 0 : index
    %53 = vector.load %arg5[%c0_25, %c0_26, %c0_27] : memref<2x4x1024xf32, #tpu.memory_space<vmem>>, vector<1x4x1024xf32>
    %54 = vector.shape_cast %53 : vector<1x4x1024xf32> to vector<4x1024xf32>
    %55 = vector.shape_cast %52 : vector<4x1024xf32> to vector<1x4x1024xf32>
    tpu.vector_store %arg5[%c0_25, %c0_26, %c0_27], %55 {strides = array<i32>} : memref<2x4x1024xf32, #tpu.memory_space<vmem>>, vector<1x4x1024xf32>,
    %56 = vector.broadcast %38 : vector<4x1xf32> to vector<4x1024xf32>
    %57 = arith.mulf %13, %56 : vector<4x1024xf32>
    %58 = vector.broadcast %41 : vector<4x1xf32> to vector<4x1024xf32>
    %59 = arith.addf %57, %58 : vector<4x1024xf32>
    %cst_28 = arith.constant 0.000000e+00 : f32
    %60 = vector.broadcast %cst_28 : f32 to vector<4x1024xf32>
    %61 = arith.subf %60, %59 : vector<4x1024xf32>
    %62 = math.exp %61 : vector<4x1024xf32>
    %cst_29 = arith.constant 1.000000e+00 : f32
    %63 = vector.broadcast %cst_29 : f32 to vector<4x1024xf32>
    %64 = arith.addf %63, %62 : vector<4x1024xf32>
    %cst_30 = arith.constant 1.000000e+00 : f32
    %65 = vector.broadcast %cst_30 : f32 to vector<4x1024xf32>
    %66 = arith.divf %65, %64 : vector<4x1024xf32>
    %c1_31 = arith.constant 1 : index
    %c0_32 = arith.constant 0 : index
    %c0_33 = arith.constant 0 : index
    %67 = vector.load %arg5[%c1_31, %c0_32, %c0_33] : memref<2x4x1024xf32, #tpu.memory_space<vmem>>, vector<1x4x1024xf32>
    %68 = vector.shape_cast %67 : vector<1x4x1024xf32> to vector<4x1024xf32>
    %69 = vector.shape_cast %66 : vector<4x1024xf32> to vector<1x4x1024xf32>
    tpu.vector_store %arg5[%c1_31, %c0_32, %c0_33], %69 {strides = array<i32>} : memref<2x4x1024xf32, #tpu.memory_space<vmem>>, vector<1x4x1024xf32>,
    return
  }
}

</mosaic_0001>

<llo_original>
// kernel: outconv_forward.1
$region0: #{outconv_forward.1}
  #allocation0 [shape = 'u32[]', space=smem, size = 0x4, offset = 0x4, fixed_abs, tag = 'smem constant byte address 0x4 - core index']
  #allocation1 [shape = 'u32[144,128]{1,0:T(1,128)}', space=vmem, size = 0x12000, scoped, tag = 'internal scratch']
  %s0 = inlined_call_operand.vmem [shape: f32[2,64,256], index: 0, kind: input, shape index: {}]
  %s1 = inlined_call_operand.vmem [shape: bf16[256,1024], index: 1, kind: input, shape index: {}]
  %s2 = inlined_call_operand.vmem [shape: bf16[4,64], index: 2, kind: input, shape index: {}]
  %s3 = inlined_call_operand.vmem [shape: f32[4,1], index: 3, kind: input, shape index: {}]
  %s4 = inlined_call_operand.vmem [shape: f32[4,1], index: 4, kind: input, shape index: {}]
  %s5 = inlined_call_operand.vmem [shape: f32[2,4,1024], index: 5, kind: output, shape index: {}]
  %s6 = sld [smem:[#allocation0]]
  $region30: #{outconv_forward.1} parent=0
    _
  %s8 = ssub.s32 1, %s6
  %s9 = scalar_select 0, %s8, %s6
  // Predicated region
  $region2: #{outconv_forward.1} parent=0 // pred_check
    _
  $region3: #{outconv_forward.1} parent=0 // pred_check_branch
    %11 = sbr.rel (0) target = $region5
  $region4: #{outconv_forward.1} parent=0 // pred_region
    _
  $region5: #{outconv_forward.1} parent=0 // pred_fallthru
    _
  // Predicated region
  $region6: #{outconv_forward.1} parent=0 // pred_check
    _
  $region7: #{outconv_forward.1} parent=0 // pred_check_branch
    %13 = sbr.rel (0) target = $region9
  $region8: #{outconv_forward.1} parent=0 // pred_region
    _
  $region9: #{outconv_forward.1} parent=0 // pred_fallthru
    _
  // Predicated region
  $region10: #{outconv_forward.1} parent=0 // pred_check
    _
  $region11: #{outconv_forward.1} parent=0 // pred_check_branch
    %15 = sbr.rel (0) target = $region13
  $region12: #{outconv_forward.1} parent=0 // pred_region
    _
  $region13: #{outconv_forward.1} parent=0 // pred_fallthru
    _
  // Predicated region
  $region14: #{outconv_forward.1} parent=0 // pred_check
    _
  $region15: #{outconv_forward.1} parent=0 // pred_check_branch
    %17 = sbr.rel (0) target = $region17
  $region16: #{outconv_forward.1} parent=0 // pred_region
    _
  $region17: #{outconv_forward.1} parent=0 // pred_fallthru
    _
  // Predicated region
  $region18: #{outconv_forward.1} parent=0 // pred_check
    _
  $region19: #{outconv_forward.1} parent=0 // pred_check_branch
    %19 = sbr.rel (0) target = $region21
  $region20: #{outconv_forward.1} parent=0 // pred_region
    _
  $region21: #{outconv_forward.1} parent=0 // pred_fallthru
    _
  %v21 = vld [vmem:[%s2] sm:$0x3]
  %v22 = vld [vmem:[%s1] sm:$0xff]
  %v23 = vld [vmem:[%s1 + $0x8] sm:$0xff]
  %v24 = vld [vmem:[%s1 + $0x10] sm:$0xff]
  %v25 = vld [vmem:[%s1 + $0x18] sm:$0xff]
  %v26 = vld [vmem:[%s1 + $0x20] sm:$0xff]
  %v27 = vld [vmem:[%s1 + $0x28] sm:$0xff]
  %v28 = vld [vmem:[%s1 + $0x30] sm:$0xff]
  %v29 = vld [vmem:[%s1 + $0x38] sm:$0xff]
  %v30 = vld [vmem:[%s1 + $0x40] sm:$0xff]
  %v31 = vld [vmem:[%s1 + $0x48] sm:$0xff]
  %v32 = vld [vmem:[%s1 + $0x50] sm:$0xff]
  %v33 = vld [vmem:[%s1 + $0x58] sm:$0xff]
  %v34 = vld [vmem:[%s1 + $0x60] sm:$0xff]
  %v35 = vld [vmem:[%s1 + $0x68] sm:$0xff]
  %v36 = vld [vmem:[%s1 + $0x70] sm:$0xff]
  %v37 = vld [vmem:[%s1 + $0x78] sm:$0xff]
  %v38 = vld [vmem:[%s1 + $0x80] sm:$0xff]
  %v39 = vld [vmem:[%s1 + $0x88] sm:$0xff]
  %v40 = vld [vmem:[%s1 + $0x90] sm:$0xff]
  %v41 = vld [vmem:[%s1 + $0x98] sm:$0xff]
  %v42 = vld [vmem:[%s1 + $0xa0] sm:$0xff]
  %v43 = vld [vmem:[%s1 + $0xa8] sm:$0xff]
  %v44 = vld [vmem:[%s1 + $0xb0] sm:$0xff]
  %v45 = vld [vmem:[%s1 + $0xb8] sm:$0xff]
  %v46 = vld [vmem:[%s1 + $0xc0] sm:$0xff]
  %v47 = vld [vmem:[%s1 + $0xc8] sm:$0xff]
  %v48 = vld [vmem:[%s1 + $0xd0] sm:$0xff]
  %v49 = vld [vmem:[%s1 + $0xd8] sm:$0xff]
  %v50 = vld [vmem:[%s1 + $0xe0] sm:$0xff]
  %v51 = vld [vmem:[%s1 + $0xe8] sm:$0xff]
  %v52 = vld [vmem:[%s1 + $0xf0] sm:$0xff]
  %v53 = vld [vmem:[%s1 + $0xf8] sm:$0xff]
  %v54 = vld [vmem:[%s1 + $0x100] sm:$0xff]
  %v55 = vld [vmem:[%s1 + $0x108] sm:$0xff]
  %v56 = vld [vmem:[%s1 + $0x110] sm:$0xff]
  %v57 = vld [vmem:[%s1 + $0x118] sm:$0xff]
  %v58 = vld [vmem:[%s1 + $0x120] sm:$0xff]
  %v59 = vld [vmem:[%s1 + $0x128] sm:$0xff]
  %v60 = vld [vmem:[%s1 + $0x130] sm:$0xff]
  %v61 = vld [vmem:[%s1 + $0x138] sm:$0xff]
  %v62 = vld [vmem:[%s1 + $0x140] sm:$0xff]
  %v63 = vld [vmem:[%s1 + $0x148] sm:$0xff]
  %v64 = vld [vmem:[%s1 + $0x150] sm:$0xff]
  %v65 = vld [vmem:[%s1 + $0x158] sm:$0xff]
  %v66 = vld [vmem:[%s1 + $0x160] sm:$0xff]
  %v67 = vld [vmem:[%s1 + $0x168] sm:$0xff]
  %v68 = vld [vmem:[%s1 + $0x170] sm:$0xff]
  %v69 = vld [vmem:[%s1 + $0x178] sm:$0xff]
  %v70 = vld [vmem:[%s1 + $0x180] sm:$0xff]
  %v71 = vld [vmem:[%s1 + $0x188] sm:$0xff]
  %v72 = vld [vmem:[%s1 + $0x190] sm:$0xff]
  %v73 = vld [vmem:[%s1 + $0x198] sm:$0xff]
  %v74 = vld [vmem:[%s1 + $0x1a0] sm:$0xff]
  %v75 = vld [vmem:[%s1 + $0x1a8] sm:$0xff]
  %v76 = vld [vmem:[%s1 + $0x1b0] sm:$0xff]
  %v77 = vld [vmem:[%s1 + $0x1b8] sm:$0xff]
  %v78 = vld [vmem:[%s1 + $0x1c0] sm:$0xff]
  %v79 = vld [vmem:[%s1 + $0x1c8] sm:$0xff]
  %v80 = vld [vmem:[%s1 + $0x1d0] sm:$0xff]
  %v81 = vld [vmem:[%s1 + $0x1d8] sm:$0xff]
  %v82 = vld [vmem:[%s1 + $0x1e0] sm:$0xff]
  %v83 = vld [vmem:[%s1 + $0x1e8] sm:$0xff]
  %v84 = vld [vmem:[%s1 + $0x1f0] sm:$0xff]
  %v85 = vld [vmem:[%s1 + $0x1f8] sm:$0xff]
  %v86 = vld [vmem:[%s1 + $0x200] sm:$0xff]
  %v87 = vld [vmem:[%s1 + $0x208] sm:$0xff]
  %v88 = vld [vmem:[%s1 + $0x210] sm:$0xff]
  %v89 = vld [vmem:[%s1 + $0x218] sm:$0xff]
  %v90 = vld [vmem:[%s1 + $0x220] sm:$0xff]
  %v91 = vld [vmem:[%s1 + $0x228] sm:$0xff]
  %v92 = vld [vmem:[%s1 + $0x230] sm:$0xff]
  %v93 = vld [vmem:[%s1 + $0x238] sm:$0xff]
  %v94 = vld [vmem:[%s1 + $0x240] sm:$0xff]
  %v95 = vld [vmem:[%s1 + $0x248] sm:$0xff]
  %v96 = vld [vmem:[%s1 + $0x250] sm:$0xff]
  %v97 = vld [vmem:[%s1 + $0x258] sm:$0xff]
  %v98 = vld [vmem:[%s1 + $0x260] sm:$0xff]
  %v99 = vld [vmem:[%s1 + $0x268] sm:$0xff]
  %v100 = vld [vmem:[%s1 + $0x270] sm:$0xff]
  %v101 = vld [vmem:[%s1 + $0x278] sm:$0xff]
  %v102 = vld [vmem:[%s1 + $0x280] sm:$0xff]
  %v103 = vld [vmem:[%s1 + $0x288] sm:$0xff]
  %v104 = vld [vmem:[%s1 + $0x290] sm:$0xff]
  %v105 = vld [vmem:[%s1 + $0x298] sm:$0xff]
  %v106 = vld [vmem:[%s1 + $0x2a0] sm:$0xff]
  %v107 = vld [vmem:[%s1 + $0x2a8] sm:$0xff]
  %v108 = vld [vmem:[%s1 + $0x2b0] sm:$0xff]
  %v109 = vld [vmem:[%s1 + $0x2b8] sm:$0xff]
  %v110 = vld [vmem:[%s1 + $0x2c0] sm:$0xff]
  %v111 = vld [vmem:[%s1 + $0x2c8] sm:$0xff]
  %v112 = vld [vmem:[%s1 + $0x2d0] sm:$0xff]
  %v113 = vld [vmem:[%s1 + $0x2d8] sm:$0xff]
  %v114 = vld [vmem:[%s1 + $0x2e0] sm:$0xff]
  %v115 = vld [vmem:[%s1 + $0x2e8] sm:$0xff]
  %v116 = vld [vmem:[%s1 + $0x2f0] sm:$0xff]
  %v117 = vld [vmem:[%s1 + $0x2f8] sm:$0xff]
  %v118 = vld [vmem:[%s1 + $0x300] sm:$0xff]
  %v119 = vld [vmem:[%s1 + $0x308] sm:$0xff]
  %v120 = vld [vmem:[%s1 + $0x310] sm:$0xff]
  %v121 = vld [vmem:[%s1 + $0x318] sm:$0xff]
  %v122 = vld [vmem:[%s1 + $0x320] sm:$0xff]
  %v123 = vld [vmem:[%s1 + $0x328] sm:$0xff]
  %v124 = vld [vmem:[%s1 + $0x330] sm:$0xff]
  %v125 = vld [vmem:[%s1 + $0x338] sm:$0xff]
  %v126 = vld [vmem:[%s1 + $0x340] sm:$0xff]
  %v127 = vld [vmem:[%s1 + $0x348] sm:$0xff]
  %v128 = vld [vmem:[%s1 + $0x350] sm:$0xff]
  %v129 = vld [vmem:[%s1 + $0x358] sm:$0xff]
  %v130 = vld [vmem:[%s1 + $0x360] sm:$0xff]
  %v131 = vld [vmem:[%s1 + $0x368] sm:$0xff]
  %v132 = vld [vmem:[%s1 + $0x370] sm:$0xff]
  %v133 = vld [vmem:[%s1 + $0x378] sm:$0xff]
  %v134 = vld [vmem:[%s1 + $0x380] sm:$0xff]
  %v135 = vld [vmem:[%s1 + $0x388] sm:$0xff]
  %v136 = vld [vmem:[%s1 + $0x390] sm:$0xff]
  %v137 = vld [vmem:[%s1 + $0x398] sm:$0xff]
  %v138 = vld [vmem:[%s1 + $0x3a0] sm:$0xff]
  %v139 = vld [vmem:[%s1 + $0x3a8] sm:$0xff]
  %v140 = vld [vmem:[%s1 + $0x3b0] sm:$0xff]
  %v141 = vld [vmem:[%s1 + $0x3b8] sm:$0xff]
  %v142 = vld [vmem:[%s1 + $0x3c0] sm:$0xff]
  %v143 = vld [vmem:[%s1 + $0x3c8] sm:$0xff]
  %v144 = vld [vmem:[%s1 + $0x3d0] sm:$0xff]
  %v145 = vld [vmem:[%s1 + $0x3d8] sm:$0xff]
  %v146 = vld [vmem:[%s1 + $0x3e0] sm:$0xff]
  %v147 = vld [vmem:[%s1 + $0x3e8] sm:$0xff]
  %v148 = vld [vmem:[%s1 + $0x3f0] sm:$0xff]
  %v149 = vld [vmem:[%s1 + $0x3f8] sm:$0xff]
  %v150 = vld [vmem:[%s0] sm:$0xff]
  %v151 = vld [vmem:[%s0 + $0x8] sm:$0xff]
  %v152 = vld [vmem:[%s0 + $0x10] sm:$0xff]
  %v153 = vld [vmem:[%s0 + $0x18] sm:$0xff]
  %v154 = vld [vmem:[%s0 + $0x20] sm:$0xff]
  %v155 = vld [vmem:[%s0 + $0x28] sm:$0xff]
  %v156 = vld [vmem:[%s0 + $0x30] sm:$0xff]
  %v157 = vld [vmem:[%s0 + $0x38] sm:$0xff]
  %v158 = vld [vmem:[%s0 + $0x40] sm:$0xff]
  %v159 = vld [vmem:[%s0 + $0x48] sm:$0xff]
  %v160 = vld [vmem:[%s0 + $0x50] sm:$0xff]
  %v161 = vld [vmem:[%s0 + $0x58] sm:$0xff]
  %v162 = vld [vmem:[%s0 + $0x60] sm:$0xff]
  %v163 = vld [vmem:[%s0 + $0x68] sm:$0xff]
  %v164 = vld [vmem:[%s0 + $0x70] sm:$0xff]
  %v165 = vld [vmem:[%s0 + $0x78] sm:$0xff]
  %v166 = vpack.c.bf16 %v152, %v150
  %v167 = vpack.c.bf16 %v153, %v151
  %v168 = vpack.c.bf16 %v156, %v154
  %v169 = vpack.c.bf16 %v157, %v155
  %v170 = vpack.c.bf16 %v160, %v158
  %v171 = vpack.c.bf16 %v161, %v159
  %v172 = vpack.c.bf16 %v164, %v162
  %v173 = vpack.c.bf16 %v165, %v163
  %vm174 = vcmask 523264
  %v176 = vsel %vm174, %v21, 0
  %178 = vmatprep.subr.bf16.mxu0 %v167
  %179 = vmatpush1.bf16.msra.mxu0 %v166
  %180 = vmatprep.subr.bf16.mxu0 %v169
  %181 = vmatpush1.bf16.msra.mxu0 %v168
  %182 = vmatprep.subr.bf16.mxu0 %v171
  %183 = vmatpush1.bf16.msra.mxu0 %v170
  %184 = vmatprep.subr.bf16.mxu0 %v173
  %185 = vmatpush1.bf16.msra.mxu0 %v172
  %186 = vmatprep.subr.bf16.mxu0 0
  %187 = vmatpush1.bf16.msra.mxu0 0
  %188 = vmatprep.subr.bf16.mxu0 0
  %189 = vmatpush1.bf16.msra.mxu0 0
  %190 = vmatprep.subr.bf16.mxu0 0
  %191 = vmatpush1.bf16.msra.mxu0 0
  %192 = vmatprep.subr.bf16.mxu0 0
  %193 = vmatpush1.bf16.msra.mxu0 0
  %194 = vmatprep.subr.bf16.mxu0 0
  %195 = vmatpush1.bf16.msra.mxu0 0
  %196 = vmatprep.subr.bf16.mxu0 0
  %197 = vmatpush1.bf16.msra.mxu0 0
  %198 = vmatprep.subr.bf16.mxu0 0
  %199 = vmatpush1.bf16.msra.mxu0 0
  %200 = vmatprep.subr.bf16.mxu0 0
  %201 = vmatpush1.bf16.msra.mxu0 0
  %202 = vmatprep.subr.bf16.mxu0 0
  %203 = vmatpush1.bf16.msra.mxu0 0
  %204 = vmatprep.subr.bf16.mxu0 0
  %205 = vmatpush1.bf16.msra.mxu0 0
  %206 = vmatprep.subr.bf16.mxu0 0
  %207 = vmatpush1.bf16.msra.mxu0 0
  %208 = vmatprep.subr.bf16.mxu0 0
  %209 = vmatpush1.bf16.msra.mxu0 0
  %210 = vmatprep.mubr.bf16.mxu0 0
  %211 = vmatmul.mubr.bf16.gmra.mrb[0].mxu0 %v176
  %v212 = vpop.f32.mrb[0].mxu0
  %v213 = vadd.f32 0.0, %v212
  %v214 = vpop.f32.mrb[0].mxu0
  %v215 = vadd.f32 0.0, %v214
  %v216 = vpop.f32.mrb[0].mxu0
  %v217 = vpop.f32.mrb[0].mxu0
  %218 = vdwg.mxu0
  %v219 = vpack.c.bf16 %v213, %v213
  %v220 = vpack.c.bf16 %v215, %v215
  %v349 = vunpack.c.l.b16 %v22
  %v350 = vunpack.c.h.b16 %v22
  %v351 = vunpack.c.l.b16 %v23
  %v352 = vunpack.c.h.b16 %v23
  %v353 = vunpack.c.l.b16 %v24
  %v354 = vunpack.c.h.b16 %v24
  %v355 = vunpack.c.l.b16 %v25
  %v356 = vunpack.c.h.b16 %v25
  %v357 = vunpack.c.l.b16 %v26
  %v358 = vunpack.c.h.b16 %v26
  %v359 = vunpack.c.l.b16 %v27
  %v360 = vunpack.c.h.b16 %v27
  %v361 = vunpack.c.l.b16 %v28
  %v362 = vunpack.c.h.b16 %v28
  %v363 = vunpack.c.l.b16 %v29
  %v364 = vunpack.c.h.b16 %v29
  %v365 = vunpack.c.l.b16 %v30
  %v366 = vunpack.c.h.b16 %v30
  %v367 = vunpack.c.l.b16 %v31
  %v368 = vunpack.c.h.b16 %v31
  %v369 = vunpack.c.l.b16 %v32
  %v370 = vunpack.c.h.b16 %v32
  %v371 = vunpack.c.l.b16 %v33
  %v372 = vunpack.c.h.b16 %v33
  %v373 = vunpack.c.l.b16 %v34
  %v374 = vunpack.c.h.b16 %v34
  %v375 = vunpack.c.l.b16 %v35
  %v376 = vunpack.c.h.b16 %v35
  %v377 = vunpack.c.l.b16 %v36
  %v378 = vunpack.c.h.b16 %v36
  %v379 = vunpack.c.l.b16 %v37
  %v380 = vunpack.c.h.b16 %v37
  %v381 = vunpack.c.l.b16 %v38
  %v382 = vunpack.c.h.b16 %v38
  %v383 = vunpack.c.l.b16 %v39
  %v384 = vunpack.c.h.b16 %v39
  %v385 = vunpack.c.l.b16 %v40
  %v386 = vunpack.c.h.b16 %v40
  %v387 = vunpack.c.l.b16 %v41
  %v388 = vunpack.c.h.b16 %v41
  %v389 = vunpack.c.l.b16 %v42
  %v390 = vunpack.c.h.b16 %v42
  %v391 = vunpack.c.l.b16 %v43
  %v392 = vunpack.c.h.b16 %v43
  %v393 = vunpack.c.l.b16 %v44
  %v394 = vunpack.c.h.b16 %v44
  %v395 = vunpack.c.l.b16 %v45
  %v396 = vunpack.c.h.b16 %v45
  %v397 = vunpack.c.l.b16 %v46
  %v398 = vunpack.c.h.b16 %v46
  %v399 = vunpack.c.l.b16 %v47
  %v400 = vunpack.c.h.b16 %v47
  %v401 = vunpack.c.l.b16 %v48
  %v402 = vunpack.c.h.b16 %v48
  %v403 = vunpack.c.l.b16 %v49
  %v404 = vunpack.c.h.b16 %v49
  %v405 = vunpack.c.l.b16 %v50
  %v406 = vunpack.c.h.b16 %v50
  %v407 = vunpack.c.l.b16 %v51
  %v408 = vunpack.c.h.b16 %v51
  %v409 = vunpack.c.l.b16 %v52
  %v410 = vunpack.c.h.b16 %v52
  %v411 = vunpack.c.l.b16 %v53
  %v412 = vunpack.c.h.b16 %v53
  %v413 = vunpack.c.l.b16 %v54
  %v414 = vunpack.c.h.b16 %v54
  %v415 = vunpack.c.l.b16 %v55
  %v416 = vunpack.c.h.b16 %v55
  %v417 = vunpack.c.l.b16 %v56
  %v418 = vunpack.c.h.b16 %v56
  %v419 = vunpack.c.l.b16 %v57
  %v420 = vunpack.c.h.b16 %v57
  %v421 = vunpack.c.l.b16 %v58
  %v422 = vunpack.c.h.b16 %v58
  %v423 = vunpack.c.l.b16 %v59
  %v424 = vunpack.c.h.b16 %v59
  %v425 = vunpack.c.l.b16 %v60
  %v426 = vunpack.c.h.b16 %v60
  %v427 = vunpack.c.l.b16 %v61
  %v428 = vunpack.c.h.b16 %v61
  %v429 = vunpack.c.l.b16 %v62
  %v430 = vunpack.c.h.b16 %v62
  %v431 = vunpack.c.l.b16 %v63
  %v432 = vunpack.c.h.b16 %v63
  %v433 = vunpack.c.l.b16 %v64
  %v434 = vunpack.c.h.b16 %v64
  %v435 = vunpack.c.l.b16 %v65
  %v436 = vunpack.c.h.b16 %v65
  %v437 = vunpack.c.l.b16 %v66
  %v438 = vunpack.c.h.b16 %v66
  %v439 = vunpack.c.l.b16 %v67
  %v440 = vunpack.c.h.b16 %v67
  %v441 = vunpack.c.l.b16 %v68
  %v442 = vunpack.c.h.b16 %v68
  %v443 = vunpack.c.l.b16 %v69
  %v444 = vunpack.c.h.b16 %v69
  %v445 = vunpack.c.l.b16 %v70
  %v446 = vunpack.c.h.b16 %v70
  %v447 = vunpack.c.l.b16 %v71
  %v448 = vunpack.c.h.b16 %v71
  %v449 = vunpack.c.l.b16 %v72
  %v450 = vunpack.c.h.b16 %v72
  %v451 = vunpack.c.l.b16 %v73
  %v452 = vunpack.c.h.b16 %v73
  %v453 = vunpack.c.l.b16 %v74
  %v454 = vunpack.c.h.b16 %v74
  %v455 = vunpack.c.l.b16 %v75
  %v456 = vunpack.c.h.b16 %v75
  %v457 = vunpack.c.l.b16 %v76
  %v458 = vunpack.c.h.b16 %v76
  %v459 = vunpack.c.l.b16 %v77
  %v460 = vunpack.c.h.b16 %v77
  %v461 = vunpack.c.l.b16 %v78
  %v462 = vunpack.c.h.b16 %v78
  %v463 = vunpack.c.l.b16 %v79
  %v464 = vunpack.c.h.b16 %v79
  %v465 = vunpack.c.l.b16 %v80
  %v466 = vunpack.c.h.b16 %v80
  %v467 = vunpack.c.l.b16 %v81
  %v468 = vunpack.c.h.b16 %v81
  %v469 = vunpack.c.l.b16 %v82
  %v470 = vunpack.c.h.b16 %v82
  %v471 = vunpack.c.l.b16 %v83
  %v472 = vunpack.c.h.b16 %v83
  %v473 = vunpack.c.l.b16 %v84
  %v474 = vunpack.c.h.b16 %v84
  %v475 = vunpack.c.l.b16 %v85
  %v476 = vunpack.c.h.b16 %v85
  %v477 = vunpack.c.l.b16 %v86
  %v478 = vunpack.c.h.b16 %v86
  %v479 = vunpack.c.l.b16 %v87
  %v480 = vunpack.c.h.b16 %v87
  %v481 = vunpack.c.l.b16 %v88
  %v482 = vunpack.c.h.b16 %v88
  %v483 = vunpack.c.l.b16 %v89
  %v484 = vunpack.c.h.b16 %v89
  %v485 = vunpack.c.l.b16 %v90
  %v486 = vunpack.c.h.b16 %v90
  %v487 = vunpack.c.l.b16 %v91
  %v488 = vunpack.c.h.b16 %v91
  %v489 = vunpack.c.l.b16 %v92
  %v490 = vunpack.c.h.b16 %v92
  %v491 = vunpack.c.l.b16 %v93
  %v492 = vunpack.c.h.b16 %v93
  %v493 = vunpack.c.l.b16 %v94
  %v494 = vunpack.c.h.b16 %v94
  %v495 = vunpack.c.l.b16 %v95
  %v496 = vunpack.c.h.b16 %v95
  %v497 = vunpack.c.l.b16 %v96
  %v498 = vunpack.c.h.b16 %v96
  %v499 = vunpack.c.l.b16 %v97
  %v500 = vunpack.c.h.b16 %v97
  %v501 = vunpack.c.l.b16 %v98
  %v502 = vunpack.c.h.b16 %v98
  %v503 = vunpack.c.l.b16 %v99
  %v504 = vunpack.c.h.b16 %v99
  %v505 = vunpack.c.l.b16 %v100
  %v506 = vunpack.c.h.b16 %v100
  %v507 = vunpack.c.l.b16 %v101
  %v508 = vunpack.c.h.b16 %v101
  %v509 = vunpack.c.l.b16 %v102
  %v510 = vunpack.c.h.b16 %v102
  %v511 = vunpack.c.l.b16 %v103
  %v512 = vunpack.c.h.b16 %v103
  %v513 = vunpack.c.l.b16 %v104
  %v514 = vunpack.c.h.b16 %v104
  %v515 = vunpack.c.l.b16 %v105
  %v516 = vunpack.c.h.b16 %v105
  %v517 = vunpack.c.l.b16 %v106
  %v518 = vunpack.c.h.b16 %v106
  %v519 = vunpack.c.l.b16 %v107
  %v520 = vunpack.c.h.b16 %v107
  %v521 = vunpack.c.l.b16 %v108
  %v522 = vunpack.c.h.b16 %v108
  %v523 = vunpack.c.l.b16 %v109
  %v524 = vunpack.c.h.b16 %v109
  %v525 = vunpack.c.l.b16 %v110
  %v526 = vunpack.c.h.b16 %v110
  %v527 = vunpack.c.l.b16 %v111
  %v528 = vunpack.c.h.b16 %v111
  %v529 = vunpack.c.l.b16 %v112
  %v530 = vunpack.c.h.b16 %v112
  %v531 = vunpack.c.l.b16 %v113
  %v532 = vunpack.c.h.b16 %v113
  %v533 = vunpack.c.l.b16 %v114
  %v534 = vunpack.c.h.b16 %v114
  %v535 = vunpack.c.l.b16 %v115
  %v536 = vunpack.c.h.b16 %v115
  %v537 = vunpack.c.l.b16 %v116
  %v538 = vunpack.c.h.b16 %v116
  %v539 = vunpack.c.l.b16 %v117
  %v540 = vunpack.c.h.b16 %v117
  %v541 = vunpack.c.l.b16 %v118
  %v542 = vunpack.c.h.b16 %v118
  %v543 = vunpack.c.l.b16 %v119
  %v544 = vunpack.c.h.b16 %v119
  %v545 = vunpack.c.l.b16 %v120
  %v546 = vunpack.c.h.b16 %v120
  %v547 = vunpack.c.l.b16 %v121
  %v548 = vunpack.c.h.b16 %v121
  %v549 = vunpack.c.l.b16 %v122
  %v550 = vunpack.c.h.b16 %v122
  %v551 = vunpack.c.l.b16 %v123
  %v552 = vunpack.c.h.b16 %v123
  %v553 = vunpack.c.l.b16 %v124
  %v554 = vunpack.c.h.b16 %v124
  %v555 = vunpack.c.l.b16 %v125
  %v556 = vunpack.c.h.b16 %v125
  %v557 = vunpack.c.l.b16 %v126
  %v558 = vunpack.c.h.b16 %v126
  %v559 = vunpack.c.l.b16 %v127
  %v560 = vunpack.c.h.b16 %v127
  %v561 = vunpack.c.l.b16 %v128
  %v562 = vunpack.c.h.b16 %v128
  %v563 = vunpack.c.l.b16 %v129
  %v564 = vunpack.c.h.b16 %v129
  %v565 = vunpack.c.l.b16 %v130
  %v566 = vunpack.c.h.b16 %v130
  %v567 = vunpack.c.l.b16 %v131
  %v568 = vunpack.c.h.b16 %v131
  %v569 = vunpack.c.l.b16 %v132
  %v570 = vunpack.c.h.b16 %v132
  %v571 = vunpack.c.l.b16 %v133
  %v572 = vunpack.c.h.b16 %v133
  %v573 = vunpack.c.l.b16 %v134
  %v574 = vunpack.c.h.b16 %v134
  %v575 = vunpack.c.l.b16 %v135
  %v576 = vunpack.c.h.b16 %v135
  %v577 = vunpack.c.l.b16 %v136
  %v578 = vunpack.c.h.b16 %v136
  %v579 = vunpack.c.l.b16 %v137
  %v580 = vunpack.c.h.b16 %v137
  %v581 = vunpack.c.l.b16 %v138
  %v582 = vunpack.c.h.b16 %v138
  %v583 = vunpack.c.l.b16 %v139
  %v584 = vunpack.c.h.b16 %v139
  %v585 = vunpack.c.l.b16 %v140
  %v586 = vunpack.c.h.b16 %v140
  %v587 = vunpack.c.l.b16 %v141
  %v588 = vunpack.c.h.b16 %v141
  %v589 = vunpack.c.l.b16 %v142
  %v590 = vunpack.c.h.b16 %v142
  %v591 = vunpack.c.l.b16 %v143
  %v592 = vunpack.c.h.b16 %v143
  %v593 = vunpack.c.l.b16 %v144
  %v594 = vunpack.c.h.b16 %v144
  %v595 = vunpack.c.l.b16 %v145
  %v596 = vunpack.c.h.b16 %v145
  %v597 = vunpack.c.l.b16 %v146
  %v598 = vunpack.c.h.b16 %v146
  %v599 = vunpack.c.l.b16 %v147
  %v600 = vunpack.c.h.b16 %v147
  %v601 = vunpack.c.l.b16 %v148
  %v602 = vunpack.c.h.b16 %v148
  %v603 = vunpack.c.l.b16 %v149
  %v604 = vunpack.c.h.b16 %v149
  %v605 = vpack.c.b16 %v357, %v349
  %v606 = vpack.c.b16 %v358, %v350
  %v607 = vpack.c.b16 %v359, %v351
  %v608 = vpack.c.b16 %v360, %v352
  %v609 = vpack.c.b16 %v361, %v353
  %v610 = vpack.c.b16 %v362, %v354
  %v611 = vpack.c.b16 %v363, %v355
  %v612 = vpack.c.b16 %v364, %v356
  %v613 = vpack.c.b16 %v373, %v365
  %v614 = vpack.c.b16 %v374, %v366
  %v615 = vpack.c.b16 %v375, %v367
  %v616 = vpack.c.b16 %v376, %v368
  %v617 = vpack.c.b16 %v377, %v369
  %v618 = vpack.c.b16 %v378, %v370
  %v619 = vpack.c.b16 %v379, %v371
  %v620 = vpack.c.b16 %v380, %v372
  %v621 = vpack.c.b16 %v389, %v381
  %v622 = vpack.c.b16 %v390, %v382
  %v623 = vpack.c.b16 %v391, %v383
  %v624 = vpack.c.b16 %v392, %v384
  %v625 = vpack.c.b16 %v393, %v385
  %v626 = vpack.c.b16 %v394, %v386
  %v627 = vpack.c.b16 %v395, %v387
  %v628 = vpack.c.b16 %v396, %v388
  %v629 = vpack.c.b16 %v405, %v397
  %v630 = vpack.c.b16 %v406, %v398
  %v631 = vpack.c.b16 %v407, %v399
  %v632 = vpack.c.b16 %v408, %v400
  %v633 = vpack.c.b16 %v409, %v401
  %v634 = vpack.c.b16 %v410, %v402
  %v635 = vpack.c.b16 %v411, %v403
  %v636 = vpack.c.b16 %v412, %v404
  %v637 = vpack.c.b16 %v421, %v413
  %v638 = vpack.c.b16 %v422, %v414
  %v639 = vpack.c.b16 %v423, %v415
  %v640 = vpack.c.b16 %v424, %v416
  %v641 = vpack.c.b16 %v425, %v417
  %v642 = vpack.c.b16 %v426, %v418
  %v643 = vpack.c.b16 %v427, %v419
  %v644 = vpack.c.b16 %v428, %v420
  %v645 = vpack.c.b16 %v437, %v429
  %v646 = vpack.c.b16 %v438, %v430
  %v647 = vpack.c.b16 %v439, %v431
  %v648 = vpack.c.b16 %v440, %v432
  %v649 = vpack.c.b16 %v441, %v433
  %v650 = vpack.c.b16 %v442, %v434
  %v651 = vpack.c.b16 %v443, %v435
  %v652 = vpack.c.b16 %v444, %v436
  %v653 = vpack.c.b16 %v453, %v445
  %v654 = vpack.c.b16 %v454, %v446
  %v655 = vpack.c.b16 %v455, %v447
  %v656 = vpack.c.b16 %v456, %v448
  %v657 = vpack.c.b16 %v457, %v449
  %v658 = vpack.c.b16 %v458, %v450
  %v659 = vpack.c.b16 %v459, %v451
  %v660 = vpack.c.b16 %v460, %v452
  %v661 = vpack.c.b16 %v469, %v461
  %v662 = vpack.c.b16 %v470, %v462
  %v663 = vpack.c.b16 %v471, %v463
  %v664 = vpack.c.b16 %v472, %v464
  %v665 = vpack.c.b16 %v473, %v465
  %v666 = vpack.c.b16 %v474, %v466
  %v667 = vpack.c.b16 %v475, %v467
  %v668 = vpack.c.b16 %v476, %v468
  %v669 = vpack.c.b16 %v485, %v477
  %v670 = vpack.c.b16 %v486, %v478
  %v671 = vpack.c.b16 %v487, %v479
  %v672 = vpack.c.b16 %v488, %v480
  %v673 = vpack.c.b16 %v489, %v481
  %v674 = vpack.c.b16 %v490, %v482
  %v675 = vpack.c.b16 %v491, %v483
  %v676 = vpack.c.b16 %v492, %v484
  %v677 = vpack.c.b16 %v501, %v493
  %v678 = vpack.c.b16 %v502, %v494
  %v679 = vpack.c.b16 %v503, %v495
  %v680 = vpack.c.b16 %v504, %v496
  %v681 = vpack.c.b16 %v505, %v497
  %v682 = vpack.c.b16 %v506, %v498
  %v683 = vpack.c.b16 %v507, %v499
  %v684 = vpack.c.b16 %v508, %v500
  %v685 = vpack.c.b16 %v517, %v509
  %v686 = vpack.c.b16 %v518, %v510
  %v687 = vpack.c.b16 %v519, %v511
  %v688 = vpack.c.b16 %v520, %v512
  %v689 = vpack.c.b16 %v521, %v513
  %v690 = vpack.c.b16 %v522, %v514
  %v691 = vpack.c.b16 %v523, %v515
  %v692 = vpack.c.b16 %v524, %v516
  %v693 = vpack.c.b16 %v533, %v525
  %v694 = vpack.c.b16 %v534, %v526
  %v695 = vpack.c.b16 %v535, %v527
  %v696 = vpack.c.b16 %v536, %v528
  %v697 = vpack.c.b16 %v537, %v529
  %v698 = vpack.c.b16 %v538, %v530
  %v699 = vpack.c.b16 %v539, %v531
  %v700 = vpack.c.b16 %v540, %v532
  %v701 = vpack.c.b16 %v549, %v541
  %v702 = vpack.c.b16 %v550, %v542
  %v703 = vpack.c.b16 %v551, %v543
  %v704 = vpack.c.b16 %v552, %v544
  %v705 = vpack.c.b16 %v553, %v545
  %v706 = vpack.c.b16 %v554, %v546
  %v707 = vpack.c.b16 %v555, %v547
  %v708 = vpack.c.b16 %v556, %v548
  %v709 = vpack.c.b16 %v565, %v557
  %v710 = vpack.c.b16 %v566, %v558
  %v711 = vpack.c.b16 %v567, %v559
  %v712 = vpack.c.b16 %v568, %v560
  %v713 = vpack.c.b16 %v569, %v561
  %v714 = vpack.c.b16 %v570, %v562
  %v715 = vpack.c.b16 %v571, %v563
  %v716 = vpack.c.b16 %v572, %v564
  %v717 = vpack.c.b16 %v581, %v573
  %v718 = vpack.c.b16 %v582, %v574
  %v719 = vpack.c.b16 %v583, %v575
  %v720 = vpack.c.b16 %v584, %v576
  %v721 = vpack.c.b16 %v585, %v577
  %v722 = vpack.c.b16 %v586, %v578
  %v723 = vpack.c.b16 %v587, %v579
  %v724 = vpack.c.b16 %v588, %v580
  %v725 = vpack.c.b16 %v597, %v589
  %v726 = vpack.c.b16 %v598, %v590
  %v727 = vpack.c.b16 %v599, %v591
  %v728 = vpack.c.b16 %v600, %v592
  %v729 = vpack.c.b16 %v601, %v593
  %v730 = vpack.c.b16 %v602, %v594
  %v731 = vpack.c.b16 %v603, %v595
  %v732 = vpack.c.b16 %v604, %v596
  %861 = vmatprep.subr.bf16.mxu0 %v606
  %862 = vmatpush1.bf16.msra.mxu0 %v605
  %863 = vmatprep.subr.bf16.mxu0 %v614
  %864 = vmatpush1.bf16.msra.mxu0 %v613
  %865 = vmatprep.subr.bf16.mxu0 %v622
  %866 = vmatpush1.bf16.msra.mxu0 %v621
  %867 = vmatprep.subr.bf16.mxu0 %v630
  %868 = vmatpush1.bf16.msra.mxu0 %v629
  %869 = vmatprep.subr.bf16.mxu0 %v638
  %870 = vmatpush1.bf16.msra.mxu0 %v637
  %871 = vmatprep.subr.bf16.mxu0 %v646
  %872 = vmatpush1.bf16.msra.mxu0 %v645
  %873 = vmatprep.subr.bf16.mxu0 %v654
  %874 = vmatpush1.bf16.msra.mxu0 %v653
  %875 = vmatprep.subr.bf16.mxu0 %v662
  %876 = vmatpush1.bf16.msra.mxu0 %v661
  %877 = vmatprep.subr.bf16.mxu0 %v670
  %878 = vmatpush1.bf16.msra.mxu0 %v669
  %879 = vmatprep.subr.bf16.mxu0 %v678
  %880 = vmatpush1.bf16.msra.mxu0 %v677
  %881 = vmatprep.subr.bf16.mxu0 %v686
  %882 = vmatpush1.bf16.msra.mxu0 %v685
  %883 = vmatprep.subr.bf16.mxu0 %v694
  %884 = vmatpush1.bf16.msra.mxu0 %v693
  %885 = vmatprep.subr.bf16.mxu0 %v702
  %886 = vmatpush1.bf16.msra.mxu0 %v701
  %887 = vmatprep.subr.bf16.mxu0 %v710
  %888 = vmatpush1.bf16.msra.mxu0 %v709
  %889 = vmatprep.subr.bf16.mxu0 %v718
  %890 = vmatpush1.bf16.msra.mxu0 %v717
  %891 = vmatprep.subr.bf16.mxu0 %v726
  %892 = vmatpush1.bf16.msra.mxu0 %v725
  %893 = vmatprep.mubr.bf16.mxu0 %v220
  %894 = vmatmul.mubr.bf16.gmra.mrb[0].mxu0 %v219
  %v895 = vpop.f32.mrb[0].mxu0
  %v896 = vadd.f32 0.0, %v895
  %v897 = vpop.f32.mrb[0].mxu0
  %v898 = vadd.f32 0.0, %v897
  %v899 = vpop.f32.mrb[0].mxu0
  %v900 = vpop.f32.mrb[0].mxu0
  %901 = vdwg.mxu0
  %902 = vmatprep.subr.bf16.mxu0 %v608
  %903 = vmatpush1.bf16.msra.mxu0 %v607
  %904 = vmatprep.subr.bf16.mxu0 %v616
  %905 = vmatpush1.bf16.msra.mxu0 %v615
  %906 = vmatprep.subr.bf16.mxu0 %v624
  %907 = vmatpush1.bf16.msra.mxu0 %v623
  %908 = vmatprep.subr.bf16.mxu0 %v632
  %909 = vmatpush1.bf16.msra.mxu0 %v631
  %910 = vmatprep.subr.bf16.mxu0 %v640
  %911 = vmatpush1.bf16.msra.mxu0 %v639
  %912 = vmatprep.subr.bf16.mxu0 %v648
  %913 = vmatpush1.bf16.msra.mxu0 %v647
  %914 = vmatprep.subr.bf16.mxu0 %v656
  %915 = vmatpush1.bf16.msra.mxu0 %v655
  %916 = vmatprep.subr.bf16.mxu0 %v664
  %917 = vmatpush1.bf16.msra.mxu0 %v663
  %918 = vmatprep.subr.bf16.mxu0 %v672
  %919 = vmatpush1.bf16.msra.mxu0 %v671
  %920 = vmatprep.subr.bf16.mxu0 %v680
  %921 = vmatpush1.bf16.msra.mxu0 %v679
  %922 = vmatprep.subr.bf16.mxu0 %v688
  %923 = vmatpush1.bf16.msra.mxu0 %v687
  %924 = vmatprep.subr.bf16.mxu0 %v696
  %925 = vmatpush1.bf16.msra.mxu0 %v695
  %926 = vmatprep.subr.bf16.mxu0 %v704
  %927 = vmatpush1.bf16.msra.mxu0 %v703
  %928 = vmatprep.subr.bf16.mxu0 %v712
  %929 = vmatpush1.bf16.msra.mxu0 %v711
  %930 = vmatprep.subr.bf16.mxu0 %v720
  %931 = vmatpush1.bf16.msra.mxu0 %v719
  %932 = vmatprep.subr.bf16.mxu0 %v728
  %933 = vmatpush1.bf16.msra.mxu0 %v727
  %934 = vmatprep.mubr.bf16.mxu0 %v220
  %935 = vmatmul.mubr.bf16.gmra.mrb[0].mxu0 %v219
  %v936 = vpop.f32.mrb[0].mxu0
  %v937 = vadd.f32 0.0, %v936
  %v938 = vpop.f32.mrb[0].mxu0
  %v939 = vadd.f32 0.0, %v938
  %v940 = vpop.f32.mrb[0].mxu0
  %v941 = vpop.f32.mrb[0].mxu0
  %942 = vdwg.mxu0
  %943 = vmatprep.subr.bf16.mxu0 %v610
  %944 = vmatpush1.bf16.msra.mxu0 %v609
  %945 = vmatprep.subr.bf16.mxu0 %v618
  %946 = vmatpush1.bf16.msra.mxu0 %v617
  %947 = vmatprep.subr.bf16.mxu0 %v626
  %948 = vmatpush1.bf16.msra.mxu0 %v625
  %949 = vmatprep.subr.bf16.mxu0 %v634
  %950 = vmatpush1.bf16.msra.mxu0 %v633
  %951 = vmatprep.subr.bf16.mxu0 %v642
  %952 = vmatpush1.bf16.msra.mxu0 %v641
  %953 = vmatprep.subr.bf16.mxu0 %v650
  %954 = vmatpush1.bf16.msra.mxu0 %v649
  %955 = vmatprep.subr.bf16.mxu0 %v658
  %956 = vmatpush1.bf16.msra.mxu0 %v657
  %957 = vmatprep.subr.bf16.mxu0 %v666
  %958 = vmatpush1.bf16.msra.mxu0 %v665
  %959 = vmatprep.subr.bf16.mxu0 %v674
  %960 = vmatpush1.bf16.msra.mxu0 %v673
  %961 = vmatprep.subr.bf16.mxu0 %v682
  %962 = vmatpush1.bf16.msra.mxu0 %v681
  %963 = vmatprep.subr.bf16.mxu0 %v690
  %964 = vmatpush1.bf16.msra.mxu0 %v689
  %965 = vmatprep.subr.bf16.mxu0 %v698
  %966 = vmatpush1.bf16.msra.mxu0 %v697
  %967 = vmatprep.subr.bf16.mxu0 %v706
  %968 = vmatpush1.bf16.msra.mxu0 %v705
  %969 = vmatprep.subr.bf16.mxu0 %v714
  %970 = vmatpush1.bf16.msra.mxu0 %v713
  %971 = vmatprep.subr.bf16.mxu0 %v722
  %972 = vmatpush1.bf16.msra.mxu0 %v721
  %973 = vmatprep.subr.bf16.mxu0 %v730
  %974 = vmatpush1.bf16.msra.mxu0 %v729
  %975 = vmatprep.mubr.bf16.mxu0 %v220
  %976 = vmatmul.mubr.bf16.gmra.mrb[0].mxu0 %v219
  %v977 = vpop.f32.mrb[0].mxu0
  %v978 = vadd.f32 0.0, %v977
  %v979 = vpop.f32.mrb[0].mxu0
  %v980 = vadd.f32 0.0, %v979
  %v981 = vpop.f32.mrb[0].mxu0
  %v982 = vpop.f32.mrb[0].mxu0
  %983 = vdwg.mxu0
  %984 = vmatprep.subr.bf16.mxu0 %v612
  %985 = vmatpush1.bf16.msra.mxu0 %v611
  %986 = vmatprep.subr.bf16.mxu0 %v620
  %987 = vmatpush1.bf16.msra.mxu0 %v619
  %988 = vmatprep.subr.bf16.mxu0 %v628
  %989 = vmatpush1.bf16.msra.mxu0 %v627
  %990 = vmatprep.subr.bf16.mxu0 %v636
  %991 = vmatpush1.bf16.msra.mxu0 %v635
  %992 = vmatprep.subr.bf16.mxu0 %v644
  %993 = vmatpush1.bf16.msra.mxu0 %v643
  %994 = vmatprep.subr.bf16.mxu0 %v652
  %995 = vmatpush1.bf16.msra.mxu0 %v651
  %996 = vmatprep.subr.bf16.mxu0 %v660
  %997 = vmatpush1.bf16.msra.mxu0 %v659
  %998 = vmatprep.subr.bf16.mxu0 %v668
  %999 = vmatpush1.bf16.msra.mxu0 %v667
  %1000 = vmatprep.subr.bf16.mxu0 %v676
  %1001 = vmatpush1.bf16.msra.mxu0 %v675
  %1002 = vmatprep.subr.bf16.mxu0 %v684
  %1003 = vmatpush1.bf16.msra.mxu0 %v683
  %1004 = vmatprep.subr.bf16.mxu0 %v692
  %1005 = vmatpush1.bf16.msra.mxu0 %v691
  %1006 = vmatprep.subr.bf16.mxu0 %v700
  %1007 = vmatpush1.bf16.msra.mxu0 %v699
  %1008 = vmatprep.subr.bf16.mxu0 %v708
  %1009 = vmatpush1.bf16.msra.mxu0 %v707
  %1010 = vmatprep.subr.bf16.mxu0 %v716
  %1011 = vmatpush1.bf16.msra.mxu0 %v715
  %1012 = vmatprep.subr.bf16.mxu0 %v724
  %1013 = vmatpush1.bf16.msra.mxu0 %v723
  %1014 = vmatprep.subr.bf16.mxu0 %v732
  %1015 = vmatpush1.bf16.msra.mxu0 %v731
  %1016 = vmatprep.mubr.bf16.mxu0 %v220
  %1017 = vmatmul.mubr.bf16.gmra.mrb[0].mxu0 %v219
  %v1018 = vpop.f32.mrb[0].mxu0
  %v1019 = vadd.f32 0.0, %v1018
  %v1020 = vpop.f32.mrb[0].mxu0
  %v1021 = vadd.f32 0.0, %v1020
  %v1022 = vpop.f32.mrb[0].mxu0
  %v1023 = vpop.f32.mrb[0].mxu0
  %1024 = vdwg.mxu0
  %s1025 = scalar_lea.vmem %s0, 128
  %v1026 = vld [vmem:[%s1025] sm:$0xff]
  %v1027 = vld [vmem:[%s1025 + $0x8] sm:$0xff]
  %v1028 = vld [vmem:[%s1025 + $0x10] sm:$0xff]
  %v1029 = vld [vmem:[%s1025 + $0x18] sm:$0xff]
  %v1030 = vld [vmem:[%s1025 + $0x20] sm:$0xff]
  %v1031 = vld [vmem:[%s1025 + $0x28] sm:$0xff]
  %v1032 = vld [vmem:[%s1025 + $0x30] sm:$0xff]
  %v1033 = vld [vmem:[%s1025 + $0x38] sm:$0xff]
  %v1034 = vld [vmem:[%s1025 + $0x40] sm:$0xff]
  %v1035 = vld [vmem:[%s1025 + $0x48] sm:$0xff]
  %v1036 = vld [vmem:[%s1025 + $0x50] sm:$0xff]
  %v1037 = vld [vmem:[%s1025 + $0x58] sm:$0xff]
  %v1038 = vld [vmem:[%s1025 + $0x60] sm:$0xff]
  %v1039 = vld [vmem:[%s1025 + $0x68] sm:$0xff]
  %v1040 = vld [vmem:[%s1025 + $0x70] sm:$0xff]
  %v1041 = vld [vmem:[%s1025 + $0x78] sm:$0xff]
  %v1042 = vpack.c.bf16 %v1028, %v1026
  %v1043 = vpack.c.bf16 %v1029, %v1027
  %v1044 = vpack.c.bf16 %v1032, %v1030
  %v1045 = vpack.c.bf16 %v1033, %v1031
  %v1046 = vpack.c.bf16 %v1036, %v1034
  %v1047 = vpack.c.bf16 %v1037, %v1035
  %v1048 = vpack.c.bf16 %v1040, %v1038
  %v1049 = vpack.c.bf16 %v1041, %v1039
  %1050 = vmatprep.subr.bf16.mxu0 %v1043
  %1051 = vmatpush1.bf16.msra.mxu0 %v1042
  %1052 = vmatprep.subr.bf16.mxu0 %v1045
  %1053 = vmatpush1.bf16.msra.mxu0 %v1044
  %1054 = vmatprep.subr.bf16.mxu0 %v1047
  %1055 = vmatpush1.bf16.msra.mxu0 %v1046
  %1056 = vmatprep.subr.bf16.mxu0 %v1049
  %1057 = vmatpush1.bf16.msra.mxu0 %v1048
  %1058 = vmatprep.subr.bf16.mxu0 0
  %1059 = vmatpush1.bf16.msra.mxu0 0
  %1060 = vmatprep.subr.bf16.mxu0 0
  %1061 = vmatpush1.bf16.msra.mxu0 0
  %1062 = vmatprep.subr.bf16.mxu0 0
  %1063 = vmatpush1.bf16.msra.mxu0 0
  %1064 = vmatprep.subr.bf16.mxu0 0
  %1065 = vmatpush1.bf16.msra.mxu0 0
  %1066 = vmatprep.subr.bf16.mxu0 0
  %1067 = vmatpush1.bf16.msra.mxu0 0
  %1068 = vmatprep.subr.bf16.mxu0 0
  %1069 = vmatpush1.bf16.msra.mxu0 0
  %1070 = vmatprep.subr.bf16.mxu0 0
  %1071 = vmatpush1.bf16.msra.mxu0 0
  %1072 = vmatprep.subr.bf16.mxu0 0
  %1073 = vmatpush1.bf16.msra.mxu0 0
  %1074 = vmatprep.subr.bf16.mxu0 0
  %1075 = vmatpush1.bf16.msra.mxu0 0
  %1076 = vmatprep.subr.bf16.mxu0 0
  %1077 = vmatpush1.bf16.msra.mxu0 0
  %1078 = vmatprep.subr.bf16.mxu0 0
  %1079 = vmatpush1.bf16.msra.mxu0 0
  %1080 = vmatprep.subr.bf16.mxu0 0
  %1081 = vmatpush1.bf16.msra.mxu0 0
  %1082 = vmatprep.mubr.bf16.mxu0 0
  %1083 = vmatmul.mubr.bf16.gmra.mrb[0].mxu0 %v176
  %v1084 = vpop.f32.mrb[0].mxu0
  %v1085 = vadd.f32 0.0, %v1084
  %v1086 = vpop.f32.mrb[0].mxu0
  %v1087 = vadd.f32 0.0, %v1086
  %v1088 = vpop.f32.mrb[0].mxu0
  %v1089 = vpop.f32.mrb[0].mxu0
  %1090 = vdwg.mxu0
  %v1091 = vpack.c.bf16 %v1085, %v1085
  %v1092 = vpack.c.bf16 %v1087, %v1087
  %1093 = vmatprep.subr.bf16.mxu0 %v606
  %1094 = vmatpush1.bf16.msra.mxu0 %v605
  %1095 = vmatprep.subr.bf16.mxu0 %v614
  %1096 = vmatpush1.bf16.msra.mxu0 %v613
  %1097 = vmatprep.subr.bf16.mxu0 %v622
  %1098 = vmatpush1.bf16.msra.mxu0 %v621
  %1099 = vmatprep.subr.bf16.mxu0 %v630
  %1100 = vmatpush1.bf16.msra.mxu0 %v629
  %1101 = vmatprep.subr.bf16.mxu0 %v638
  %1102 = vmatpush1.bf16.msra.mxu0 %v637
  %1103 = vmatprep.subr.bf16.mxu0 %v646
  %1104 = vmatpush1.bf16.msra.mxu0 %v645
  %1105 = vmatprep.subr.bf16.mxu0 %v654
  %1106 = vmatpush1.bf16.msra.mxu0 %v653
  %1107 = vmatprep.subr.bf16.mxu0 %v662
  %1108 = vmatpush1.bf16.msra.mxu0 %v661
  %1109 = vmatprep.subr.bf16.mxu0 %v670
  %1110 = vmatpush1.bf16.msra.mxu0 %v669
  %1111 = vmatprep.subr.bf16.mxu0 %v678
  %1112 = vmatpush1.bf16.msra.mxu0 %v677
  %1113 = vmatprep.subr.bf16.mxu0 %v686
  %1114 = vmatpush1.bf16.msra.mxu0 %v685
  %1115 = vmatprep.subr.bf16.mxu0 %v694
  %1116 = vmatpush1.bf16.msra.mxu0 %v693
  %1117 = vmatprep.subr.bf16.mxu0 %v702
  %1118 = vmatpush1.bf16.msra.mxu0 %v701
  %1119 = vmatprep.subr.bf16.mxu0 %v710
  %1120 = vmatpush1.bf16.msra.mxu0 %v709
  %1121 = vmatprep.subr.bf16.mxu0 %v718
  %1122 = vmatpush1.bf16.msra.mxu0 %v717
  %1123 = vmatprep.subr.bf16.mxu0 %v726
  %1124 = vmatpush1.bf16.msra.mxu0 %v725
  %1125 = vmatprep.mubr.bf16.mxu0 %v1092
  %1126 = vmatmul.mubr.bf16.gmra.mrb[0].mxu0 %v1091
  %v1127 = vpop.f32.mrb[0].mxu0
  %v1128 = vadd.f32 0.0, %v1127
  %v1129 = vpop.f32.mrb[0].mxu0
  %v1130 = vadd.f32 0.0, %v1129
  %v1131 = vpop.f32.mrb[0].mxu0
  %v1132 = vpop.f32.mrb[0].mxu0
  %1133 = vdwg.mxu0
  %1134 = vmatprep.subr.bf16.mxu0 %v608
  %1135 = vmatpush1.bf16.msra.mxu0 %v607
  %1136 = vmatprep.subr.bf16.mxu0 %v616
  %1137 = vmatpush1.bf16.msra.mxu0 %v615
  %1138 = vmatprep.subr.bf16.mxu0 %v624
  %1139 = vmatpush1.bf16.msra.mxu0 %v623
  %1140 = vmatprep.subr.bf16.mxu0 %v632
  %1141 = vmatpush1.bf16.msra.mxu0 %v631
  %1142 = vmatprep.subr.bf16.mxu0 %v640
  %1143 = vmatpush1.bf16.msra.mxu0 %v639
  %1144 = vmatprep.subr.bf16.mxu0 %v648
  %1145 = vmatpush1.bf16.msra.mxu0 %v647
  %1146 = vmatprep.subr.bf16.mxu0 %v656
  %1147 = vmatpush1.bf16.msra.mxu0 %v655
  %1148 = vmatprep.subr.bf16.mxu0 %v664
  %1149 = vmatpush1.bf16.msra.mxu0 %v663
  %1150 = vmatprep.subr.bf16.mxu0 %v672
  %1151 = vmatpush1.bf16.msra.mxu0 %v671
  %1152 = vmatprep.subr.bf16.mxu0 %v680
  %1153 = vmatpush1.bf16.msra.mxu0 %v679
  %1154 = vmatprep.subr.bf16.mxu0 %v688
  %1155 = vmatpush1.bf16.msra.mxu0 %v687
  %1156 = vmatprep.subr.bf16.mxu0 %v696
  %1157 = vmatpush1.bf16.msra.mxu0 %v695
  %1158 = vmatprep.subr.bf16.mxu0 %v704
  %1159 = vmatpush1.bf16.msra.mxu0 %v703
  %1160 = vmatprep.subr.bf16.mxu0 %v712
  %1161 = vmatpush1.bf16.msra.mxu0 %v711
  %1162 = vmatprep.subr.bf16.mxu0 %v720
  %1163 = vmatpush1.bf16.msra.mxu0 %v719
  %1164 = vmatprep.subr.bf16.mxu0 %v728
  %1165 = vmatpush1.bf16.msra.mxu0 %v727
  %1166 = vmatprep.mubr.bf16.mxu0 %v1092
  %1167 = vmatmul.mubr.bf16.gmra.mrb[0].mxu0 %v1091
  %v1168 = vpop.f32.mrb[0].mxu0
  %v1169 = vadd.f32 0.0, %v1168
  %v1170 = vpop.f32.mrb[0].mxu0
  %v1171 = vadd.f32 0.0, %v1170
  %v1172 = vpop.f32.mrb[0].mxu0
  %v1173 = vpop.f32.mrb[0].mxu0
  %1174 = vdwg.mxu0
  %1175 = vmatprep.subr.bf16.mxu0 %v610
  %1176 = vmatpush1.bf16.msra.mxu0 %v609
  %1177 = vmatprep.subr.bf16.mxu0 %v618
  %1178 = vmatpush1.bf16.msra.mxu0 %v617
  %1179 = vmatprep.subr.bf16.mxu0 %v626
  %1180 = vmatpush1.bf16.msra.mxu0 %v625
  %1181 = vmatprep.subr.bf16.mxu0 %v634
  %1182 = vmatpush1.bf16.msra.mxu0 %v633
  %1183 = vmatprep.subr.bf16.mxu0 %v642
  %1184 = vmatpush1.bf16.msra.mxu0 %v641
  %1185 = vmatprep.subr.bf16.mxu0 %v650
  %1186 = vmatpush1.bf16.msra.mxu0 %v649
  %1187 = vmatprep.subr.bf16.mxu0 %v658
  %1188 = vmatpush1.bf16.msra.mxu0 %v657
  %1189 = vmatprep.subr.bf16.mxu0 %v666
  %1190 = vmatpush1.bf16.msra.mxu0 %v665
  %1191 = vmatprep.subr.bf16.mxu0 %v674
  %1192 = vmatpush1.bf16.msra.mxu0 %v673
  %1193 = vmatprep.subr.bf16.mxu0 %v682
  %1194 = vmatpush1.bf16.msra.mxu0 %v681
  %1195 = vmatprep.subr.bf16.mxu0 %v690
  %1196 = vmatpush1.bf16.msra.mxu0 %v689
  %1197 = vmatprep.subr.bf16.mxu0 %v698
  %1198 = vmatpush1.bf16.msra.mxu0 %v697
  %1199 = vmatprep.subr.bf16.mxu0 %v706
  %1200 = vmatpush1.bf16.msra.mxu0 %v705
  %1201 = vmatprep.subr.bf16.mxu0 %v714
  %1202 = vmatpush1.bf16.msra.mxu0 %v713
  %1203 = vmatprep.subr.bf16.mxu0 %v722
  %1204 = vmatpush1.bf16.msra.mxu0 %v721
  %1205 = vmatprep.subr.bf16.mxu0 %v730
  %1206 = vmatpush1.bf16.msra.mxu0 %v729
  %1207 = vmatprep.mubr.bf16.mxu0 %v1092
  %1208 = vmatmul.mubr.bf16.gmra.mrb[0].mxu0 %v1091
  %v1209 = vpop.f32.mrb[0].mxu0
  %v1210 = vadd.f32 0.0, %v1209
  %v1211 = vpop.f32.mrb[0].mxu0
  %v1212 = vadd.f32 0.0, %v1211
  %v1213 = vpop.f32.mrb[0].mxu0
  %v1214 = vpop.f32.mrb[0].mxu0
  %1215 = vdwg.mxu0
  %1216 = vmatprep.subr.bf16.mxu0 %v612
  %1217 = vmatpush1.bf16.msra.mxu0 %v611
  %1218 = vmatprep.subr.bf16.mxu0 %v620
  %1219 = vmatpush1.bf16.msra.mxu0 %v619
  %1220 = vmatprep.subr.bf16.mxu0 %v628
  %1221 = vmatpush1.bf16.msra.mxu0 %v627
  %1222 = vmatprep.subr.bf16.mxu0 %v636
  %1223 = vmatpush1.bf16.msra.mxu0 %v635
  %1224 = vmatprep.subr.bf16.mxu0 %v644
  %1225 = vmatpush1.bf16.msra.mxu0 %v643
  %1226 = vmatprep.subr.bf16.mxu0 %v652
  %1227 = vmatpush1.bf16.msra.mxu0 %v651
  %1228 = vmatprep.subr.bf16.mxu0 %v660
  %1229 = vmatpush1.bf16.msra.mxu0 %v659
  %1230 = vmatprep.subr.bf16.mxu0 %v668
  %1231 = vmatpush1.bf16.msra.mxu0 %v667
  %1232 = vmatprep.subr.bf16.mxu0 %v676
  %1233 = vmatpush1.bf16.msra.mxu0 %v675
  %1234 = vmatprep.subr.bf16.mxu0 %v684
  %1235 = vmatpush1.bf16.msra.mxu0 %v683
  %1236 = vmatprep.subr.bf16.mxu0 %v692
  %1237 = vmatpush1.bf16.msra.mxu0 %v691
  %1238 = vmatprep.subr.bf16.mxu0 %v700
  %1239 = vmatpush1.bf16.msra.mxu0 %v699
  %1240 = vmatprep.subr.bf16.mxu0 %v708
  %1241 = vmatpush1.bf16.msra.mxu0 %v707
  %1242 = vmatprep.subr.bf16.mxu0 %v716
  %1243 = vmatpush1.bf16.msra.mxu0 %v715
  %1244 = vmatprep.subr.bf16.mxu0 %v724
  %1245 = vmatpush1.bf16.msra.mxu0 %v723
  %1246 = vmatprep.subr.bf16.mxu0 %v732
  %1247 = vmatpush1.bf16.msra.mxu0 %v731
  %1248 = vmatprep.mubr.bf16.mxu0 %v1092
  %1249 = vmatmul.mubr.bf16.gmra.mrb[0].mxu0 %v1091
  %v1250 = vpop.f32.mrb[0].mxu0
  %v1251 = vadd.f32 0.0, %v1250
  %v1252 = vpop.f32.mrb[0].mxu0
  %v1253 = vadd.f32 0.0, %v1252
  %v1254 = vpop.f32.mrb[0].mxu0
  %v1255 = vpop.f32.mrb[0].mxu0
  %1256 = vdwg.mxu0
  %v1257 = vadd.f32 %v896, %v1128
  %v1258 = vadd.f32 %v898, %v1130
  %v1259 = vadd.f32 %v937, %v1169
  %v1260 = vadd.f32 %v939, %v1171
  %v1261 = vadd.f32 %v978, %v1210
  %v1262 = vadd.f32 %v980, %v1212
  %v1263 = vadd.f32 %v1019, %v1251
  %v1264 = vadd.f32 %v1021, %v1253
  %vm1265 = vcmask 1043456
  %v1266 = vsel %vm1265, %v1257, 0.0
  %v1267 = vsel %vm1265, %v1258, 0.0
  %v1268 = vadd.f32 %v1266, %v1267
  %v1269 = vsel %vm1265, %v1259, 0.0
  %v1270 = vadd.f32 %v1268, %v1269
  %v1271 = vsel %vm1265, %v1260, 0.0
  %v1272 = vadd.f32 %v1270, %v1271
  %v1273 = vsel %vm1265, %v1261, 0.0
  %v1274 = vadd.f32 %v1272, %v1273
  %v1275 = vsel %vm1265, %v1262, 0.0
  %v1276 = vadd.f32 %v1274, %v1275
  %v1277 = vsel %vm1265, %v1263, 0.0
  %v1278 = vadd.f32 %v1276, %v1277
  %v1279 = vsel %vm1265, %v1264, 0.0
  %v1280 = vadd.f32 %v1278, %v1279
  %1281 = vadd.xlane.f32.xlu0 %v1280
  %v1282 = vpop.xlane.xlu0 %1281
  %v1283 = vmul.f32 %v1282, 0.00048828125
  %v1284 = vsub.f32 %v896, %v1283
  %v1285 = vsub.f32 %v898, %v1283
  %v1286 = vsub.f32 %v937, %v1283
  %v1287 = vsub.f32 %v939, %v1283
  %v1288 = vsub.f32 %v978, %v1283
  %v1289 = vsub.f32 %v980, %v1283
  %v1290 = vsub.f32 %v1019, %v1283
  %v1291 = vsub.f32 %v1021, %v1283
  %v1292 = vmul.f32 %v1284, %v1284
  %v1293 = vmul.f32 %v1285, %v1285
  %v1294 = vmul.f32 %v1286, %v1286
  %v1295 = vmul.f32 %v1287, %v1287
  %v1296 = vmul.f32 %v1288, %v1288
  %v1297 = vmul.f32 %v1289, %v1289
  %v1298 = vmul.f32 %v1290, %v1290
  %v1299 = vmul.f32 %v1291, %v1291
  %v1300 = vsel %vm1265, %v1292, 0.0
  %v1301 = vsel %vm1265, %v1293, 0.0
  %v1302 = vadd.f32 %v1300, %v1301
  %v1303 = vsel %vm1265, %v1294, 0.0
  %v1304 = vadd.f32 %v1302, %v1303
  %v1305 = vsel %vm1265, %v1295, 0.0
  %v1306 = vadd.f32 %v1304, %v1305
  %v1307 = vsel %vm1265, %v1296, 0.0
  %v1308 = vadd.f32 %v1306, %v1307
  %v1309 = vsel %vm1265, %v1297, 0.0
  %v1310 = vadd.f32 %v1308, %v1309
  %v1311 = vsel %vm1265, %v1298, 0.0
  %v1312 = vadd.f32 %v1310, %v1311
  %v1313 = vsel %vm1265, %v1299, 0.0
  %v1314 = vadd.f32 %v1312, %v1313
  %1315 = vadd.xlane.f32.xlu0 %v1314
  %v1316 = vpop.xlane.xlu0 %1315
  %v1317 = vadd.f32 %v1316, 0.0
  %v1318 = vsub.f32 %v1128, %v1283
  %v1319 = vsub.f32 %v1130, %v1283
  %v1320 = vsub.f32 %v1169, %v1283
  %v1321 = vsub.f32 %v1171, %v1283
  %v1322 = vsub.f32 %v1210, %v1283
  %v1323 = vsub.f32 %v1212, %v1283
  %v1324 = vsub.f32 %v1251, %v1283
  %v1325 = vsub.f32 %v1253, %v1283
  %v1326 = vmul.f32 %v1318, %v1318
  %v1327 = vmul.f32 %v1319, %v1319
  %v1328 = vmul.f32 %v1320, %v1320
  %v1329 = vmul.f32 %v1321, %v1321
  %v1330 = vmul.f32 %v1322, %v1322
  %v1331 = vmul.f32 %v1323, %v1323
  %v1332 = vmul.f32 %v1324, %v1324
  %v1333 = vmul.f32 %v1325, %v1325
  %v1334 = vsel %vm1265, %v1326, 0.0
  %v1335 = vsel %vm1265, %v1327, 0.0
  %v1336 = vadd.f32 %v1334, %v1335
  %v1337 = vsel %vm1265, %v1328, 0.0
  %v1338 = vadd.f32 %v1336, %v1337
  %v1339 = vsel %vm1265, %v1329, 0.0
  %v1340 = vadd.f32 %v1338, %v1339
  %v1341 = vsel %vm1265, %v1330, 0.0
  %v1342 = vadd.f32 %v1340, %v1341
  %v1343 = vsel %vm1265, %v1331, 0.0
  %v1344 = vadd.f32 %v1342, %v1343
  %v1345 = vsel %vm1265, %v1332, 0.0
  %v1346 = vadd.f32 %v1344, %v1345
  %v1347 = vsel %vm1265, %v1333, 0.0
  %v1348 = vadd.f32 %v1346, %v1347
  %1349 = vadd.xlane.f32.xlu0 %v1348
  %v1350 = vpop.xlane.xlu0 %1349
  %v1351 = vadd.f32 %v1317, %v1350
  %v1352 = vmul.f32 %v1351, 0.00048828125
  %v1353 = vadd.f32 %v1352, 1e-05
  %v1354 = vrsqrt.pop %v1353
  %v1355 = vld [vmem:[%s3] sm:$0xf]
  %v1356 = vmul.f32 %v1355, %v1354
  %v1357 = vld [vmem:[%s4] sm:$0xf]
  %v1358 = vmul.f32 %v1283, %v1356
  %v1359 = vsub.f32 %v1357, %v1358
  %1361 = vset.pattern.permute.xlu0 0
  %1362 = vperm.xlu0 %1361, %v1356
  %v1363 = vpop.permute.xlu0 %1362
  %v1365 = vmul.f32 %v896, %v1363
  %v1366 = vmul.f32 %v898, %v1363
  %v1367 = vmul.f32 %v937, %v1363
  %v1368 = vmul.f32 %v939, %v1363
  %v1369 = vmul.f32 %v978, %v1363
  %v1370 = vmul.f32 %v980, %v1363
  %v1371 = vmul.f32 %v1019, %v1363
  %v1372 = vmul.f32 %v1021, %v1363
  %1374 = vset.pattern.permute.xlu0 0
  %1375 = vperm.xlu0 %1374, %v1359
  %v1376 = vpop.permute.xlu0 %1375
  %v1378 = vadd.f32 %v1365, %v1376
  %v1379 = vadd.f32 %v1366, %v1376
  %v1380 = vadd.f32 %v1367, %v1376
  %v1381 = vadd.f32 %v1368, %v1376
  %v1382 = vadd.f32 %v1369, %v1376
  %v1383 = vadd.f32 %v1370, %v1376
  %v1384 = vadd.f32 %v1371, %v1376
  %v1385 = vadd.f32 %v1372, %v1376
  %v1386 = vsub.f32 0.0, %v1378
  %v1387 = vsub.f32 0.0, %v1379
  %v1388 = vsub.f32 0.0, %v1380
  %v1389 = vsub.f32 0.0, %v1381
  %v1390 = vsub.f32 0.0, %v1382
  %v1391 = vsub.f32 0.0, %v1383
  %v1392 = vsub.f32 0.0, %v1384
  %v1393 = vsub.f32 0.0, %v1385
  %v1394 = vmul.f32 %v1386, 1.442695
  %v1395 = vpow.pop %v1394
  %v1396 = vmul.f32 %v1387, 1.442695
  %v1397 = vpow.pop %v1396
  %v1398 = vmul.f32 %v1388, 1.442695
  %v1399 = vpow.pop %v1398
  %v1400 = vmul.f32 %v1389, 1.442695
  %v1401 = vpow.pop %v1400
  %v1402 = vmul.f32 %v1390, 1.442695
  %v1403 = vpow.pop %v1402
  %v1404 = vmul.f32 %v1391, 1.442695
  %v1405 = vpow.pop %v1404
  %v1406 = vmul.f32 %v1392, 1.442695
  %v1407 = vpow.pop %v1406
  %v1408 = vmul.f32 %v1393, 1.442695
  %v1409 = vpow.pop %v1408
  %v1410 = vadd.f32 %v1395, 1.0
  %v1411 = vadd.f32 %v1397, 1.0
  %v1412 = vadd.f32 %v1399, 1.0
  %v1413 = vadd.f32 %v1401, 1.0
  %v1414 = vadd.f32 %v1403, 1.0
  %v1415 = vadd.f32 %v1405, 1.0
  %v1416 = vadd.f32 %v1407, 1.0
  %v1417 = vadd.f32 %v1409, 1.0
  %v1418 = vrcp.pop %v1410
  %v1419 = vmul.f32 1.0, %v1418
  %v1420 = vrcp.pop %v1411
  %v1421 = vmul.f32 1.0, %v1420
  %v1422 = vrcp.pop %v1412
  %v1423 = vmul.f32 1.0, %v1422
  %v1424 = vrcp.pop %v1413
  %v1425 = vmul.f32 1.0, %v1424
  %v1426 = vrcp.pop %v1414
  %v1427 = vmul.f32 1.0, %v1426
  %v1428 = vrcp.pop %v1415
  %v1429 = vmul.f32 1.0, %v1428
  %v1430 = vrcp.pop %v1416
  %v1431 = vmul.f32 1.0, %v1430
  %v1432 = vrcp.pop %v1417
  %v1433 = vmul.f32 1.0, %v1432
  %v1442 = vcombine.low %v1419, %v1421
  %v1443 = vcombine.low %v1423, %v1425
  %v1444 = vcombine.low %v1427, %v1429
  %v1445 = vcombine.low %v1431, %v1433
  %1450 = vst [vmem:[%s5] sm:$0xff] %v1442
  %1451 = vst [vmem:[%s5 + $0x8] sm:$0xff] %v1443
  %1452 = vst [vmem:[%s5 + $0x10] sm:$0xff] %v1444
  %1453 = vst [vmem:[%s5 + $0x18] sm:$0xff] %v1445
  %v1454 = vmul.f32 %v1128, %v1363
  %v1455 = vmul.f32 %v1130, %v1363
  %v1456 = vmul.f32 %v1169, %v1363
  %v1457 = vmul.f32 %v1171, %v1363
  %v1458 = vmul.f32 %v1210, %v1363
  %v1459 = vmul.f32 %v1212, %v1363
  %v1460 = vmul.f32 %v1251, %v1363
  %v1461 = vmul.f32 %v1253, %v1363
  %v1462 = vadd.f32 %v1454, %v1376
  %v1463 = vadd.f32 %v1455, %v1376
  %v1464 = vadd.f32 %v1456, %v1376
  %v1465 = vadd.f32 %v1457, %v1376
  %v1466 = vadd.f32 %v1458, %v1376
  %v1467 = vadd.f32 %v1459, %v1376
  %v1468 = vadd.f32 %v1460, %v1376
  %v1469 = vadd.f32 %v1461, %v1376
  %v1470 = vsub.f32 0.0, %v1462
  %v1471 = vsub.f32 0.0, %v1463
  %v1472 = vsub.f32 0.0, %v1464
  %v1473 = vsub.f32 0.0, %v1465
  %v1474 = vsub.f32 0.0, %v1466
  %v1475 = vsub.f32 0.0, %v1467
  %v1476 = vsub.f32 0.0, %v1468
  %v1477 = vsub.f32 0.0, %v1469
  %v1478 = vmul.f32 %v1470, 1.442695
  %v1479 = vpow.pop %v1478
  %v1480 = vmul.f32 %v1471, 1.442695
  %v1481 = vpow.pop %v1480
  %v1482 = vmul.f32 %v1472, 1.442695
  %v1483 = vpow.pop %v1482
  %v1484 = vmul.f32 %v1473, 1.442695
  %v1485 = vpow.pop %v1484
  %v1486 = vmul.f32 %v1474, 1.442695
  %v1487 = vpow.pop %v1486
  %v1488 = vmul.f32 %v1475, 1.442695
  %v1489 = vpow.pop %v1488
  %v1490 = vmul.f32 %v1476, 1.442695
  %v1491 = vpow.pop %v1490
  %v1492 = vmul.f32 %v1477, 1.442695
  %v1493 = vpow.pop %v1492
  %v1494 = vadd.f32 %v1479, 1.0
  %v1495 = vadd.f32 %v1481, 1.0
  %v1496 = vadd.f32 %v1483, 1.0
  %v1497 = vadd.f32 %v1485, 1.0
  %v1498 = vadd.f32 %v1487, 1.0
  %v1499 = vadd.f32 %v1489, 1.0
  %v1500 = vadd.f32 %v1491, 1.0
  %v1501 = vadd.f32 %v1493, 1.0
  %v1502 = vrcp.pop %v1494
  %v1503 = vmul.f32 1.0, %v1502
  %v1504 = vrcp.pop %v1495
  %v1505 = vmul.f32 1.0, %v1504
  %v1506 = vrcp.pop %v1496
  %v1507 = vmul.f32 1.0, %v1506
  %v1508 = vrcp.pop %v1497
  %v1509 = vmul.f32 1.0, %v1508
  %v1510 = vrcp.pop %v1498
  %v1511 = vmul.f32 1.0, %v1510
  %v1512 = vrcp.pop %v1499
  %v1513 = vmul.f32 1.0, %v1512
  %v1514 = vrcp.pop %v1500
  %v1515 = vmul.f32 1.0, %v1514
  %v1516 = vrcp.pop %v1501
  %v1517 = vmul.f32 1.0, %v1516
  %v1526 = vcombine.low %v1503, %v1505
  %v1527 = vcombine.low %v1507, %v1509
  %v1528 = vcombine.low %v1511, %v1513
  %v1529 = vcombine.low %v1515, %v1517
  %s1534 = scalar_lea.vmem %s5, 32
  %1535 = vst [vmem:[%s1534] sm:$0xff] %v1526
  %1536 = vst [vmem:[%s1534 + $0x8] sm:$0xff] %v1527
  %1537 = vst [vmem:[%s1534 + $0x10] sm:$0xff] %v1528
  %1538 = vst [vmem:[%s1534 + $0x18] sm:$0xff] %v1529
  // Predicated region
  $region22: #{outconv_forward.1} parent=0 // pred_check
    _
  $region23: #{outconv_forward.1} parent=0 // pred_check_branch
    %1540 = sbr.rel (0) target = $region25
  $region24: #{outconv_forward.1} parent=0 // pred_region
    _
  $region25: #{outconv_forward.1} parent=0 // pred_fallthru
    _
  // Predicated region
  $region26: #{outconv_forward.1} parent=0 // pred_check
    _
  $region27: #{outconv_forward.1} parent=0 // pred_check_branch
    %1542 = sbr.rel (0) target = $region29
  $region28: #{outconv_forward.1} parent=0 // pred_region
    _
  $region29: #{outconv_forward.1} parent=0 // pred_fallthru
    _

</llo_original>
